<compile_context>
chip_gen: v5e
topology: v5e:2x2
jax: 0.10.0
libtpu: 0.0.40
codegen_flags: <defaults>
</compile_context>

<pallas_src>
import jax
import jax.numpy as jnp
from jax.experimental import pallas as pl
from jax.experimental.pallas import tpu as pltpu

LAYERS = 3
IN_DIM = 4
HID = 64
OUT_DIM = 3
BN_EPS = 1e-5
_TM_MAX = 256          # destination-row tile for the A @ h streaming matmul


def _round_up(x, m):
    return (x + m - 1) // m * m


def _vmem_limit(need_bytes):
    """Generation-aware scoped-VMEM limit (v7x: 64 MiB physical, v5e/v6e: 128)."""
    try:
        cap = int(pltpu.get_tpu_info().vmem_capacity_bytes)
    except Exception:  # conservative fallback = v7x per-TC VMEM
        cap = 64 << 20
    return int(min(int(cap * 0.9), max(int(need_bytes), 32 << 20)))


# --------------------------------------------------------------------------
# Kernels
# --------------------------------------------------------------------------
def _embed_kernel(x_ref, w_ref, b_ref, o_ref):
    """Linear(4, 64) on a row tile of nodes.  Dropout(p=0.4) = identity (eval)."""
    h = jnp.dot(x_ref[...], w_ref[...], preferred_element_type=jnp.float32) + b_ref[...]
    o_ref[...] = h.astype(o_ref.dtype)


def _leconv_kernel(a_ref, h_full_ref, h_self_ref, deg_ref, w_ref, b0_ref, b1_ref, o_ref):
    """One LEConv (+ folded BN) + ReLU for a tile of destination rows.

    a_ref      : [TM, N]  bf16   streamed row tile of the weighted adjacency
    h_full_ref : [N, H]   bf16   full node features (RHS of A @ h)
    h_self_ref : [TM, H]  bf16   the same features, this tile's rows
    deg_ref    : [TM, 1]  f32    weighted in-degree of this tile's rows
    w_ref      : [3H, H]  bf16   [W3*s ; W1*s ; -W2*s]
    b0_ref     : [1, H]   f32    b3*s + (beta - mean*s)
    b1_ref     : [1, H]   f32    b1*s
    """
    f32, bf16 = jnp.float32, jnp.bfloat16
    deg = deg_ref[...]                                              # [TM, 1]
    h_self = h_self_ref[...]                                        # [TM, H]

    # Dominant MXU work; the BlockSpec pipeline overlaps the next A tile's DMA.
    ah = jnp.dot(a_ref[...], h_full_ref[...], preferred_element_type=f32)   # [TM, H]

    feat = jnp.concatenate(
        [h_self, ah.astype(bf16), (deg * h_self.astype(f32)).astype(bf16)],
        axis=-1)                                                    # [TM, 3H] bf16
    bias = b0_ref[...] + deg * b1_ref[...]                          # [TM, H] f32 (lane splat)
    out = jnp.dot(feat, w_ref[...], preferred_element_type=f32) + bias
    # TODO(synk): [TM, 64] bf16 writeback is below a 128-lane tile (masked
    # stores); negligible next to the [TM, N] A traffic, so left as-is.
    o_ref[...] = jnp.maximum(out, 0.0).astype(o_ref.dtype)


def _head_kernel(p_ref, h_ref, l1w_ref, l1b_ref, l2w_ref, l2b_ref, o_ref):
    """global_mean_pool (as P @ h) -> Linear(64,64) -> ReLU -> Linear(64,3)."""
    f32, bf16 = jnp.float32, jnp.bfloat16
    # TODO(synk): second F.dropout(p=0.4) treated as identity (inference).
    g = jnp.dot(p_ref[...], h_ref[...], preferred_element_type=f32)          # [G, H]
    p = jnp.maximum(
        jnp.dot(g.astype(bf16), l1w_ref[...], preferred_element_type=f32)
        + l1b_ref[...], 0.0)
    o_ref[...] = (jnp.dot(p.astype(bf16), l2w_ref[...], preferred_element_type=f32)
                  + l2b_ref[...])


# --------------------------------------------------------------------------
# Forward
# --------------------------------------------------------------------------
def ba3net_forward(x, edge_index, edge_attr, batch, num_graphs, params, layers=LAYERS):
    """x: [N, 4] f32, edge_index: [2, E] i32, edge_attr: [E] f32, batch: [N] i32."""
    n = x.shape[0]
    src, dst = edge_index[0], edge_index[1]
    f32, bf16 = jnp.float32, jnp.bfloat16

    # Glue: edge list -> dense weighted adjacency (messages flow src -> dst).
    A = jnp.zeros((n, n), f32).at[dst, src].add(edge_attr.astype(f32))
    deg = A.sum(axis=1, keepdims=True)                                # [N, 1]

    # Glue: batch vector -> mean-pool matrix.
    onehot = (batch[None, :] == jnp.arange(num_graphs)[:, None]).astype(f32)
    P = onehot / jnp.maximum(onehot.sum(axis=1, keepdims=True), 1.0)  # [G, N]

    # Pad N so the destination-row grid tiles evenly.  Padded nodes are inert:
    # zero adjacency rows/cols, deg 0, zero pooling weight.
    tm = min(_TM_MAX, _round_up(n, 8))
    n_pad = _round_up(n, tm)
    pad = n_pad - n
    if pad:
        A = jnp.pad(A, ((0, pad), (0, pad)))
        deg = jnp.pad(deg, ((0, pad), (0, 0)))
        P = jnp.pad(P, ((0, 0), (0, pad)))
        x = jnp.pad(x, ((0, pad), (0, 0)))

    # Fold eval-mode BatchNorm, fuse [W3|W1|-W2] along K (matches the in-kernel
    # feature order [h | A@h | deg*h]) — all in f32 on the host.
    s = params["bn_g"] * jax.lax.rsqrt(params["bn_v"] + BN_EPS)       # [L,1,H]
    shift = params["bn_b"] - params["bn_m"] * s                       # [L,1,H]
    wcat = jnp.concatenate(
        [params["w3"] * s, params["w1"] * s, -(params["w2"] * s)], axis=1)  # [L,3H,H]
    b0 = params["b3"] * s + shift                                     # [L,1,H]
    b1 = params["b1"] * s                                             # [L,1,H]

    A_b, P_b, x_b = A.astype(bf16), P.astype(bf16), x.astype(bf16)
    wcat_b = wcat.astype(bf16)
    emb_w = params["emb_w"].astype(bf16)
    l1_w = params["l1_w"].astype(bf16)
    l2_w = params["l2_w"].astype(bf16)

    grid = (n_pad // tm,)
    row_par = ("parallel",)

    # ---- node embedding (Linear 4->64), gridded over row tiles ----
    embed_need = 2 * (tm * 128 * 2 + tm * 128 * 2) + (2 << 20)
    h = pl.pallas_call(
        _embed_kernel,
        out_shape=jax.ShapeDtypeStruct((n_pad, HID), bf16),
        grid=grid,
        in_specs=[pl.BlockSpec((tm, IN_DIM), lambda i: (i, 0)),
                  pl.BlockSpec((IN_DIM, HID), lambda i: (0, 0)),
                  pl.BlockSpec((1, HID), lambda i: (0, 0))],
        out_specs=pl.BlockSpec((tm, HID), lambda i: (i, 0)),
        compiler_params=pltpu.CompilerParams(
            dimension_semantics=row_par,
            vmem_limit_bytes=_vmem_limit(embed_need)),
    )(x_b, emb_w, params["emb_b"])

    # ---- stacked LEConv (+ folded BN) -> ReLU, one gridded call per layer ----
    layer_need = (2 * (tm * n_pad * 2          # A tile, double-buffered
                       + n_pad * HID * 2       # full h
                       + tm * HID * 2          # self-row h tile
                       + tm * 128 * 4          # deg tile (lane-padded)
                       + 3 * HID * HID * 2     # Wcat
                       + tm * HID * 2)         # output tile
                  + (6 << 20))                 # intermediates / headroom
    layer_flops = 2 * n_pad * n_pad * HID + 2 * n_pad * (3 * HID) * HID
    layer_bytes = n_pad * n_pad * 2 + 4 * n_pad * HID * 2 + 3 * HID * HID * 2
    layer_cp = pltpu.CompilerParams(
        dimension_semantics=row_par,
        vmem_limit_bytes=_vmem_limit(layer_need))
    layer_ce = pl.CostEstimate(flops=int(layer_flops), transcendentals=0,
                               bytes_accessed=int(layer_bytes))

    for l in range(layers):
        h = pl.pallas_call(
            _leconv_kernel,
            out_shape=jax.ShapeDtypeStruct((n_pad, HID), bf16),
            grid=grid,
            in_specs=[pl.BlockSpec((tm, n_pad), lambda i: (i, 0)),     # A row tile
                      pl.BlockSpec((n_pad, HID), lambda i: (0, 0)),    # full h
                      pl.BlockSpec((tm, HID), lambda i: (i, 0)),       # self rows
                      pl.BlockSpec((tm, 1), lambda i: (i, 0)),         # deg tile
                      pl.BlockSpec((3 * HID, HID), lambda i: (0, 0)),  # Wcat
                      pl.BlockSpec((1, HID), lambda i: (0, 0)),        # b3*s + shift
                      pl.BlockSpec((1, HID), lambda i: (0, 0))],       # b1*s
            out_specs=pl.BlockSpec((tm, HID), lambda i: (i, 0)),
            compiler_params=layer_cp,
            cost_estimate=layer_ce,
        )(A_b, h, h, deg, wcat_b[l], b0[l], b1[l])

    # ---- global mean pool + prediction head (tiny; grid-less) ----
    head_need = 2 * (num_graphs * n_pad * 2 + n_pad * HID * 2) + (2 << 20)
    vmem = pl.BlockSpec(memory_space=pltpu.MemorySpace.VMEM)
    out = pl.pallas_call(
        _head_kernel,
        out_shape=jax.ShapeDtypeStruct((num_graphs, OUT_DIM), jnp.float32),
        in_specs=[vmem] * 6,
        out_specs=vmem,
        compiler_params=pltpu.CompilerParams(
            vmem_limit_bytes=_vmem_limit(head_need)),
    )(P_b, h, l1_w, params["l1_b"], l2_w, params["l2_b"])
    return out


# --------------------------------------------------------------------------
# Params / reference / self-test
# --------------------------------------------------------------------------
def init_params(key, layers=LAYERS):
    """Deterministic PyTorch-Linear-style init (uniform +-1/sqrt(fan_in))."""
    def lin(k, fan_in, fan_out, bias=True):
        kw, kb = jax.random.split(k)
        lim = 1.0 / (fan_in ** 0.5)
        w = jax.random.uniform(kw, (fan_in, fan_out), jnp.float32, -lim, lim)
        b = (jax.random.uniform(kb, (1, fan_out), jnp.float32, -lim, lim)
             if bias else None)
        return w, b

    keys = jax.random.split(key, 3 + 3 * layers)
    emb_w, emb_b = lin(keys[0], IN_DIM, HID)

    w1, b1, w2, w3, b3 = [], [], [], [], []
    for i in range(layers):
        w, b = lin(keys[1 + 3 * i], HID, HID); w1.append(w); b1.append(b)
        w, _ = lin(keys[2 + 3 * i], HID, HID, bias=False); w2.append(w)
        w, b = lin(keys[3 + 3 * i], HID, HID); w3.append(w); b3.append(b)

    l1_w, l1_b = lin(keys[1 + 3 * layers], HID, HID)
    l2_w, l2_b = lin(keys[2 + 3 * layers], HID, OUT_DIM)

    return dict(
        emb_w=emb_w, emb_b=emb_b,
        w1=jnp.stack(w1), b1=jnp.stack(b1),
        w2=jnp.stack(w2),
        w3=jnp.stack(w3), b3=jnp.stack(b3),
        # BatchNorm default init / running stats (gamma=1, beta=0, mean=0, var=1)
        bn_g=jnp.ones((layers, 1, HID), jnp.float32),
        bn_b=jnp.zeros((layers, 1, HID), jnp.float32),
        bn_m=jnp.zeros((layers, 1, HID), jnp.float32),
        bn_v=jnp.ones((layers, 1, HID), jnp.float32),
        l1_w=l1_w, l1_b=l1_b, l2_w=l2_w, l2_b=l2_b,
    )


def _reference_forward(x, edge_index, edge_attr, batch, num_graphs, params, layers=LAYERS):
    """Pure-JAX f32 reference (un-fused, un-folded) for a correctness check."""
    n = x.shape[0]
    src, dst = edge_index[0], edge_index[1]
    A = jnp.zeros((n, n), jnp.float32).at[dst, src].add(edge_attr.astype(jnp.float32))
    deg = A.sum(axis=1, keepdims=True)
    onehot = (batch[None, :] == jnp.arange(num_graphs)[:, None]).astype(jnp.float32)
    P = onehot / jnp.maximum(onehot.sum(axis=1, keepdims=True), 1.0)

    h = x @ params["emb_w"] + params["emb_b"]
    for l in range(layers):
        a = h @ params["w1"][l] + params["b1"][l]
        b = h @ params["w2"][l]
        c = h @ params["w3"][l] + params["b3"][l]
        h = c + A @ a - deg * b
        inv = jax.lax.rsqrt(params["bn_v"][l] + BN_EPS)
        h = (h - params["bn_m"][l]) * inv * params["bn_g"][l] + params["bn_b"][l]
        h = jnp.maximum(h, 0.0)
    g = P @ h
    p = jnp.maximum(g @ params["l1_w"] + params["l1_b"], 0.0)
    return p @ params["l2_w"] + params["l2_b"]


if __name__ == "__main__":
    key = jax.random.PRNGKey(0)
    kx, ke, ka, kp = jax.random.split(key, 4)

    num_graphs = 2
    nodes_per_graph = 8
    edges_per_graph = 16
    n_nodes = num_graphs * nodes_per_graph

    # Node features: [N, 4]
    x = jax.random.normal(kx, (n_nodes, IN_DIM), jnp.float32)

    # Random edges, each graph's edges stay within its own node range.
    gkeys = jax.random.split(ke, num_graphs)
    srcs, dsts = [], []
    for g in range(num_graphs):
        k1, k2 = jax.random.split(gkeys[g])
        srcs.append(jax.random.randint(k1, (edges_per_graph,), 0, nodes_per_graph)
                    + g * nodes_per_graph)
        dsts.append(jax.random.randint(k2, (edges_per_graph,), 0, nodes_per_graph)
                    + g * nodes_per_graph)
    edge_index = jnp.stack([jnp.concatenate(srcs), jnp.concatenate(dsts)]).astype(jnp.int32)
    edge_attr = jax.random.uniform(ka, (num_graphs * edges_per_graph,), jnp.float32)
    batch = jnp.repeat(jnp.arange(num_graphs, dtype=jnp.int32), nodes_per_graph)

    params = init_params(kp, LAYERS)

    out = ba3net_forward(x, edge_index, edge_attr, batch, num_graphs, params)
    out = jax.block_until_ready(out)

    ref = _reference_forward(x, edge_index, edge_attr, batch, num_graphs, params)
    assert out.shape == (num_graphs, OUT_DIM)
    assert bool(jnp.all(jnp.isfinite(out)))
    # bf16 MXU operands (f32 accumulation) -> loosened tolerance vs. f32 reference.
    assert bool(jnp.allclose(out, ref, atol=5e-2, rtol=5e-2)), (out, ref)

    print("KERNEL_OK")
</pallas_src>

<mosaic_0001>
module attributes {stable_mosaic.version = 11 : i64} {
  func.func @_embed_kernel(%arg0: i32, %arg1: memref<16x4xbf16, #tpu.memory_space<vmem>>, %arg2: memref<4x64xbf16, #tpu.memory_space<vmem>>, %arg3: memref<1x64xf32, #tpu.memory_space<vmem>>, %arg4: memref<16x64xbf16, #tpu.memory_space<vmem>>) attributes {dimension_semantics = [#tpu.dimension_semantics<parallel>], iteration_bounds = array<i64: 1>, scalar_prefetch = 0 : i64, scratch_operands = 0 : i64, tpu.core_type = #tpu.core_type<tc>, window_params = [{transform_indices = @transform_0, window_bounds = array<i64: 16, 4>}, {pipeline_mode = #tpu.pipeline_mode<synchronous>, transform_indices = @transform_1, window_bounds = array<i64: 4, 64>}, {pipeline_mode = #tpu.pipeline_mode<synchronous>, transform_indices = @transform_2, window_bounds = array<i64: 1, 64>}, {transform_indices = @transform_3, window_bounds = array<i64: 16, 64>}]} {
    %c0 = arith.constant 0 : index
    %c0_0 = arith.constant 0 : index
    %0 = vector.load %arg1[%c0, %c0_0] : memref<16x4xbf16, #tpu.memory_space<vmem>>, vector<16x4xbf16>
    %c0_1 = arith.constant 0 : index
    %c0_2 = arith.constant 0 : index
    %1 = vector.load %arg2[%c0_1, %c0_2] : memref<4x64xbf16, #tpu.memory_space<vmem>>, vector<4x64xbf16>
    %cst = arith.constant dense<0.000000e+00> : vector<16x64xf32>
    %2 = tpu.matmul %0, %1, %cst {dimension_numbers = #tpu.dot_dimension_numbers<[1], [0], [0], [1], [0, 0, 1, 1], [], []>} : vector<16x4xbf16>, vector<4x64xbf16>, vector<16x64xf32> -> vector<16x64xf32>
    %c0_3 = arith.constant 0 : index
    %c0_4 = arith.constant 0 : index
    %3 = vector.load %arg3[%c0_3, %c0_4] : memref<1x64xf32, #tpu.memory_space<vmem>>, vector<1x64xf32>
    %4 = vector.broadcast %3 : vector<1x64xf32> to vector<16x64xf32>
    %5 = arith.addf %2, %4 : vector<16x64xf32>
    %6 = arith.truncf %5 : vector<16x64xf32> to vector<16x64xbf16>
    %c0_5 = arith.constant 0 : index
    %c0_6 = arith.constant 0 : index
    %7 = vector.load %arg4[%c0_5, %c0_6] : memref<16x64xbf16, #tpu.memory_space<vmem>>, vector<16x64xbf16>
    tpu.vector_store %arg4[%c0_5, %c0_6], %6 {strides = array<i32>} : memref<16x64xbf16, #tpu.memory_space<vmem>>, vector<16x64xbf16>,
    return
  }
  func.func @transform_0(%arg0: i32) -> (i32, i32) {
    %c0_i32 = arith.constant 0 : i32
    %c0_i32_0 = arith.constant 0 : i32
    return %arg0, %c0_i32 : i32, i32
  }
  func.func @transform_1(%arg0: i32) -> (i32, i32) {
    %c0_i32 = arith.constant 0 : i32
    %c0_i32_0 = arith.constant 0 : i32
    %c0_i32_1 = arith.constant 0 : i32
    return %c0_i32, %c0_i32_0 : i32, i32
  }
  func.func @transform_2(%arg0: i32) -> (i32, i32) {
    %c0_i32 = arith.constant 0 : i32
    %c0_i32_0 = arith.constant 0 : i32
    %c0_i32_1 = arith.constant 0 : i32
    return %c0_i32, %c0_i32_0 : i32, i32
  }
  func.func @transform_3(%arg0: i32) -> (i32, i32) {
    %c0_i32 = arith.constant 0 : i32
    %c0_i32_0 = arith.constant 0 : i32
    return %arg0, %c0_i32 : i32, i32
  }
}

</mosaic_0001>

<llo_original>
// kernel: tpu_custom_call.1
$region0: #{tpu_custom_call.1}
  #allocation0 [shape = 'u32[]', space=smem, size = 0x4, offset = 0x4, fixed_abs, tag = 'smem constant byte address 0x4 - core index']
  #allocation1 [shape = 'u32[72,128]{1,0:T(1,128)}', space=vmem, size = 0x9000, scoped, tag = 'internal scratch']
  %s0 = inlined_call_operand.vmem [shape: bf16[16,4], index: 0, kind: input, shape index: {}]
  %s1 = inlined_call_operand.vmem [shape: bf16[4,64], index: 1, kind: input, shape index: {}]
  %s2 = inlined_call_operand.vmem [shape: f32[1,64], index: 2, kind: input, shape index: {}]
  %s3 = inlined_call_operand.hbm [shape: bf16[16,64], index: 3, kind: output, shape index: {}]
  %s4 = sld [smem:[#allocation0]]
  $region22: #{tpu_custom_call.1} parent=0
    _
  %s6 = ssub.s32 1, %s4
  %s7 = scalar_select 0, %s6, %s4
  $region1: #{tpu_custom_call.1} parent=0
    #allocation2 [shape = 'u8[4096]{0}', space=vmem, size = 0x1000, scoped, tag = 'output window, operand 0, single buffered']
    #allocation3 [shape = 's32[1]{0}', space=sflag, size = 0x4, scoped, tag = 'scoped memory for tpu_custom_call.1']
    %8 = vsyncpa [#allocation3], 0
    // Predicated region
    $region2: #{tpu_custom_call.1} parent=1 // pred_check
      _
    $region3: #{tpu_custom_call.1} parent=1 // pred_check_branch
      %10 = sbr.rel (0) target = $region5
    $region4: #{tpu_custom_call.1} parent=1 // pred_region
      _
    $region5: #{tpu_custom_call.1} parent=1 // pred_fallthru
      _
    // Predicated region
    $region6: #{tpu_custom_call.1} parent=1 // pred_check
      _
    $region7: #{tpu_custom_call.1} parent=1 // pred_check_branch
      %12 = sbr.rel (0) target = $region9
    $region8: #{tpu_custom_call.1} parent=1 // pred_region
      _
    $region9: #{tpu_custom_call.1} parent=1 // pred_fallthru
      _
    // Predicated region
    $region10: #{tpu_custom_call.1} parent=1 // pred_check
      _
    $region11: #{tpu_custom_call.1} parent=1 // pred_check_branch
      %14 = sbr.rel (0) target = $region13
    $region12: #{tpu_custom_call.1} parent=1 // pred_region
      _
    $region13: #{tpu_custom_call.1} parent=1 // pred_fallthru
      _
    %v16 = vld [vmem:[%s0] sm:$0xf]
    %v17 = vld [vmem:[%s0 + $0x4] sm:$0xf]
    %v18 = vld [vmem:[%s1] sm:$0x3]
    %v19 = vld [vmem:[%s2] sm:$0x1]
    %v21 = vperm.slane %v19, 0
    %v25 = vunpack.c.l.b16 %v16
    %v26 = vunpack.c.l.b16 %v17
    %v27 = vpack.c.b16 %v26, %v25
    %vm28 = vcmask 31744
    %v30 = vsel %vm28, %v27, 0
    %vm32 = vcmask 1041408
    %v34 = vsel %vm32, %v18, 0
    %36 = vmatpush.bf16.msra.mxu0 0
    %37 = vmatpush.bf16.msra.mxu0 0
    %38 = vmatpush.bf16.msra.mxu0 0
    %39 = vmatpush.bf16.msra.mxu0 0
    %40 = vmatpush.bf16.msra.mxu0 0
    %41 = vmatpush.bf16.msra.mxu0 0
    %42 = vmatpush.bf16.msra.mxu0 0
    %43 = vmatpush.bf16.msra.mxu0 %v34
    %44 = vmatmul.bf16.gmra.mxu0 %v30
    %v45 = vpop.f32.mrf.mxu0
    %v46 = vadd.f32 %v21, %v45
    %v47 = vpop.f32.mrf.mxu0
    %v48 = vadd.f32 %v21, %v47
    %49 = vdwg.mxu0
    %v50 = vpack.c.bf16 %v46, %v46
    %v51 = vpack.c.bf16 %v48, %v48
    %vm52 = vcmask 519168
    %53 = vst.msk [vmem:[#allocation2] sm:$0xf] %vm52, %v50
    %54 = vst.msk [vmem:[#allocation2 + $0x4] sm:$0xf] %vm52, %v51
    // Predicated region
    $region14: #{tpu_custom_call.1} parent=1 // pred_check
      _
    $region15: #{tpu_custom_call.1} parent=1 // pred_check_branch
      %56 = sbr.rel (0) target = $region17
    $region16: #{tpu_custom_call.1} parent=1 // pred_region
      %58 = vsyncadd [#allocation3], 0
      %s59 = sshll.u32 [#allocation2], 4
      %s60 = int_to_ptr.vmem [resolvable:$true] %s59
      %s61 = sshll.u32 %s3, 4
      %s62 = int_to_ptr.hbm [resolvable:$true] %s61
      %67 = dma.vmem_to_hbm [thread:$0]  %s60, 128, %s62, [#allocation3], 64, 64, 4
    $region17: #{tpu_custom_call.1} parent=1 // pred_fallthru
      _
    // Predicated region
    $region18: #{tpu_custom_call.1} parent=1 // pred_check
      _
    $region19: #{tpu_custom_call.1} parent=1 // pred_check_branch
      %69 = sbr.rel (0) target = $region21
    $region20: #{tpu_custom_call.1} parent=1 // pred_region
      %71 = dma.done [#allocation3], 128
    $region21: #{tpu_custom_call.1} parent=1 // pred_fallthru
      _
    %72 = vsyncpa [#allocation3], 1

</llo_original>
